<compile_context>
chip_gen: v5e
topology: v5e:2x2
jax: 0.10.0
libtpu: 0.0.40
codegen_flags: <defaults>
</compile_context>

<pallas_src>
import jax
import jax.numpy as jnp
from jax.experimental import pallas as pl
from jax.experimental.pallas import tpu as pltpu

IN_F = 3
HIDDEN = 5
OUT_F = 3

LANE = 128                   # f32 lane width
SUBLANES = 8                 # f32 sublanes per vreg
TILE_MIN = SUBLANES * LANE   # 1024: one full vreg of batch per feature row
MAX_TB = 128 * 1024          # max batch elements per grid step (~1.5 MiB/feature-set)


def _round_up(n, m):
    return ((n + m - 1) // m) * m


def _sigmoid(v):
    # One EUP tanh push per slab; avoids a VPU divide / exp+recip pair.
    return 0.5 * jnp.tanh(0.5 * v) + 0.5


def mlp_kernel(xT_ref, w12_ref, b2_ref, w3_ref, b3_ref, oT_ref):
    """Batch-dense MLP block.

    xT_ref : [IN_F, SB, 128]   VMEM  (batch on sublanes x lanes)
    w12_ref: [IN_F, HIDDEN]    SMEM  (fc1 folded into fc2, [in, out] layout)
    b2_ref : [HIDDEN]          SMEM
    w3_ref : [OUT_F, HIDDEN]   SMEM  (PyTorch [out, in] layout)
    b3_ref : [OUT_F]           SMEM
    oT_ref : [OUT_F, SB, 128]  VMEM
    """
    # Fully dense [SB, 128] slabs, one per input feature.
    x = [xT_ref[i] for i in range(IN_F)]

    # --- folded fc1+fc2:  h[j] = sigmoid(sum_i W12[i, j] * x[i] + b2[j]) ---
    h = []
    for j in range(HIDDEN):
        acc = x[0] * w12_ref[0, j]
        for i in range(1, IN_F):
            acc = acc + x[i] * w12_ref[i, j]
        h.append(_sigmoid(acc + b2_ref[j]))

    # --- fc3:  y[o] = sigmoid(sum_j W3[o, j] * h[j] + b3[o]) ---
    for o in range(OUT_F):
        acc = h[0] * w3_ref[o, 0]
        for j in range(1, HIDDEN):
            acc = acc + h[j] * w3_ref[o, j]
        oT_ref[o] = _sigmoid(acc + b3_ref[o])


def _choose_tiling(B):
    """Pick (tile_batch, padded_batch, num_steps).

    - pad batch only to a 1024 multiple (full vreg density, minimal waste)
    - cap the tile at MAX_TB (keeps double-buffered blocks well under the
      v7x 32 MiB scoped-VMEM default)
    - force >=2 grid steps when there is enough work so the "parallel" axis
      can shard across v7x's two TensorCores.
    """
    b_min = _round_up(max(B, 1), TILE_MIN)
    num_steps = (b_min + MAX_TB - 1) // MAX_TB
    if num_steps < 2 and b_min >= 2 * TILE_MIN:
        num_steps = 2
    num_steps = max(num_steps, 1)
    tb = _round_up((b_min + num_steps - 1) // num_steps, TILE_MIN)
    return tb, tb * num_steps, num_steps


def net_forward(x, w1, w2, b2, w3, b3):
    """x: [B, IN_F] float32.  Weights/biases in PyTorch nn.Linear layout:
    w1 [HIDDEN, IN_F], w2 [HIDDEN, HIDDEN], b2 [HIDDEN],
    w3 [OUT_F, HIDDEN], b3 [OUT_F]."""
    B = x.shape[0]

    # ---- trace-time algebra / layout glue (outside the kernel) ----
    # Fold fc1 (no bias) into fc2:  [IN_F, HIDDEN]
    w12 = jnp.dot(w1.T.astype(jnp.float32), w2.T.astype(jnp.float32),
                  preferred_element_type=jnp.float32)
    b2f = b2.astype(jnp.float32)
    w3f = w3.astype(jnp.float32)
    b3f = b3.astype(jnp.float32)

    tb, b_pad, num_steps = _choose_tiling(B)
    sb = tb // LANE

    # One fused pad + transpose + (free row-major) reshape:
    # [B, IN_F] -> [IN_F, b_pad] -> [IN_F, b_pad/128, 128]
    xT = jnp.pad(x.astype(jnp.float32), ((0, b_pad - B), (0, 0))).T
    xT = xT.reshape(IN_F, b_pad // LANE, LANE)

    oT = pl.pallas_call(
        mlp_kernel,
        out_shape=jax.ShapeDtypeStruct((OUT_F, b_pad // LANE, LANE),
                                       jnp.float32),
        grid=(num_steps,),
        in_specs=[
            # activations: dense (sublane, lane) VMEM blocks tiled over batch
            pl.BlockSpec((IN_F, sb, LANE), lambda i: (0, i, 0)),
            # tiny parameters: whole arrays resident in SMEM (scalar reads)
            pl.BlockSpec(memory_space=pltpu.MemorySpace.SMEM),  # w12
            pl.BlockSpec(memory_space=pltpu.MemorySpace.SMEM),  # b2
            pl.BlockSpec(memory_space=pltpu.MemorySpace.SMEM),  # w3
            pl.BlockSpec(memory_space=pltpu.MemorySpace.SMEM),  # b3
        ],
        out_specs=pl.BlockSpec((OUT_F, sb, LANE), lambda i: (0, i, 0)),
        compiler_params=pltpu.CompilerParams(
            dimension_semantics=("parallel",)),
    )(xT, w12, b2f, w3f, b3f)

    # Slice off batch padding BEFORE transposing back to [B, OUT_F].
    return oT.reshape(OUT_F, b_pad)[:, :B].T


def init_params(key):
    """Deterministic synthetic parameters with PyTorch nn.Linear shapes."""
    k1, k2, k3, k4, k5 = jax.random.split(key, 5)
    w1 = jax.random.normal(k1, (HIDDEN, IN_F), jnp.float32) * 0.5    # fc1.weight
    w2 = jax.random.normal(k2, (HIDDEN, HIDDEN), jnp.float32) * 0.5  # fc2.weight
    b2 = jax.random.normal(k3, (HIDDEN,), jnp.float32) * 0.1         # fc2.bias
    w3 = jax.random.normal(k4, (OUT_F, HIDDEN), jnp.float32) * 0.5   # fc3.weight
    b3 = jax.random.normal(k5, (OUT_F,), jnp.float32) * 0.1          # fc3.bias
    return w1, w2, b2, w3, b3


def _reference(x, w1, w2, b2, w3, b3):
    # Pure-JAX reference (same semantics as the PyTorch forward, un-folded).
    return jax.nn.sigmoid(
        jax.nn.sigmoid((x @ w1.T) @ w2.T + b2) @ w3.T + b3)


if __name__ == "__main__":
    key = jax.random.PRNGKey(0)
    kx, kx2, kp = jax.random.split(key, 3)
    w1, w2, b2, w3, b3 = init_params(kp)

    # Small batch (single grid step).
    B = 8
    x = jax.random.normal(kx, (B, IN_F), jnp.float32)
    out = jax.block_until_ready(net_forward(x, w1, w2, b2, w3, b3))
    ref = _reference(x, w1, w2, b2, w3, b3)
    assert out.shape == (B, OUT_F)
    assert jnp.allclose(out, ref, atol=1e-5, rtol=1e-5)

    # Non-multiple batch exercising the multi-step (>=2 TC) grid + padding.
    B2 = 2053
    x2 = jax.random.normal(kx2, (B2, IN_F), jnp.float32)
    out2 = jax.block_until_ready(net_forward(x2, w1, w2, b2, w3, b3))
    ref2 = _reference(x2, w1, w2, b2, w3, b3)
    assert out2.shape == (B2, OUT_F)
    assert jnp.allclose(out2, ref2, atol=1e-5, rtol=1e-5)

    print("KERNEL_OK")
</pallas_src>

<mosaic_0001>
module attributes {stable_mosaic.version = 11 : i64} {
  func.func @mlp_kernel(%arg0: i32, %arg1: memref<3x8x128xf32, #tpu.memory_space<vmem>>, %arg2: memref<3x5xf32, #tpu.memory_space<smem>>, %arg3: memref<5xf32, #tpu.memory_space<smem>>, %arg4: memref<3x5xf32, #tpu.memory_space<smem>>, %arg5: memref<3xf32, #tpu.memory_space<smem>>, %arg6: memref<3x8x128xf32, #tpu.memory_space<vmem>>) attributes {dimension_semantics = [#tpu.dimension_semantics<parallel>], iteration_bounds = array<i64: 1>, scalar_prefetch = 0 : i64, scratch_operands = 0 : i64, tpu.core_type = #tpu.core_type<tc>, window_params = [{transform_indices = @transform_0, window_bounds = array<i64: 3, 8, 128>}, {transform_indices = @transform_1, window_bounds = array<i64: 3, 5>}, {transform_indices = @transform_2, window_bounds = array<i64: 5>}, {transform_indices = @transform_3, window_bounds = array<i64: 3, 5>}, {transform_indices = @transform_4, window_bounds = array<i64: 3>}, {transform_indices = @transform_5, window_bounds = array<i64: 3, 8, 128>}]} {
    %c0 = arith.constant 0 : index
    %c0_0 = arith.constant 0 : index
    %c0_1 = arith.constant 0 : index
    %0 = vector.load %arg1[%c0, %c0_0, %c0_1] : memref<3x8x128xf32, #tpu.memory_space<vmem>>, vector<1x8x128xf32>
    %1 = vector.shape_cast %0 : vector<1x8x128xf32> to vector<8x128xf32>
    %c1 = arith.constant 1 : index
    %c0_2 = arith.constant 0 : index
    %c0_3 = arith.constant 0 : index
    %2 = vector.load %arg1[%c1, %c0_2, %c0_3] : memref<3x8x128xf32, #tpu.memory_space<vmem>>, vector<1x8x128xf32>
    %3 = vector.shape_cast %2 : vector<1x8x128xf32> to vector<8x128xf32>
    %c2 = arith.constant 2 : index
    %c0_4 = arith.constant 0 : index
    %c0_5 = arith.constant 0 : index
    %4 = vector.load %arg1[%c2, %c0_4, %c0_5] : memref<3x8x128xf32, #tpu.memory_space<vmem>>, vector<1x8x128xf32>
    %5 = vector.shape_cast %4 : vector<1x8x128xf32> to vector<8x128xf32>
    %c0_6 = arith.constant 0 : index
    %c0_7 = arith.constant 0 : index
    %6 = memref.load %arg2[%c0_6, %c0_7] : memref<3x5xf32, #tpu.memory_space<smem>>
    %7 = vector.broadcast %6 : f32 to vector<8x128xf32>
    %8 = arith.mulf %1, %7 : vector<8x128xf32>
    %c1_8 = arith.constant 1 : index
    %c0_9 = arith.constant 0 : index
    %9 = memref.load %arg2[%c1_8, %c0_9] : memref<3x5xf32, #tpu.memory_space<smem>>
    %10 = vector.broadcast %9 : f32 to vector<8x128xf32>
    %11 = arith.mulf %3, %10 : vector<8x128xf32>
    %12 = arith.addf %8, %11 : vector<8x128xf32>
    %c2_10 = arith.constant 2 : index
    %c0_11 = arith.constant 0 : index
    %13 = memref.load %arg2[%c2_10, %c0_11] : memref<3x5xf32, #tpu.memory_space<smem>>
    %14 = vector.broadcast %13 : f32 to vector<8x128xf32>
    %15 = arith.mulf %5, %14 : vector<8x128xf32>
    %16 = arith.addf %12, %15 : vector<8x128xf32>
    %c0_12 = arith.constant 0 : index
    %17 = memref.load %arg3[%c0_12] : memref<5xf32, #tpu.memory_space<smem>>
    %18 = vector.broadcast %17 : f32 to vector<8x128xf32>
    %19 = arith.addf %16, %18 : vector<8x128xf32>
    %cst = arith.constant 5.000000e-01 : f32
    %20 = vector.broadcast %cst : f32 to vector<8x128xf32>
    %21 = arith.mulf %20, %19 : vector<8x128xf32>
    %22 = math.tanh %21 : vector<8x128xf32>
    %cst_13 = arith.constant 5.000000e-01 : f32
    %23 = vector.broadcast %cst_13 : f32 to vector<8x128xf32>
    %24 = arith.mulf %23, %22 : vector<8x128xf32>
    %cst_14 = arith.constant 5.000000e-01 : f32
    %25 = vector.broadcast %cst_14 : f32 to vector<8x128xf32>
    %26 = arith.addf %24, %25 : vector<8x128xf32>
    %c0_15 = arith.constant 0 : index
    %c1_16 = arith.constant 1 : index
    %27 = memref.load %arg2[%c0_15, %c1_16] : memref<3x5xf32, #tpu.memory_space<smem>>
    %28 = vector.broadcast %27 : f32 to vector<8x128xf32>
    %29 = arith.mulf %1, %28 : vector<8x128xf32>
    %c1_17 = arith.constant 1 : index
    %c1_18 = arith.constant 1 : index
    %30 = memref.load %arg2[%c1_17, %c1_18] : memref<3x5xf32, #tpu.memory_space<smem>>
    %31 = vector.broadcast %30 : f32 to vector<8x128xf32>
    %32 = arith.mulf %3, %31 : vector<8x128xf32>
    %33 = arith.addf %29, %32 : vector<8x128xf32>
    %c2_19 = arith.constant 2 : index
    %c1_20 = arith.constant 1 : index
    %34 = memref.load %arg2[%c2_19, %c1_20] : memref<3x5xf32, #tpu.memory_space<smem>>
    %35 = vector.broadcast %34 : f32 to vector<8x128xf32>
    %36 = arith.mulf %5, %35 : vector<8x128xf32>
    %37 = arith.addf %33, %36 : vector<8x128xf32>
    %c1_21 = arith.constant 1 : index
    %38 = memref.load %arg3[%c1_21] : memref<5xf32, #tpu.memory_space<smem>>
    %39 = vector.broadcast %38 : f32 to vector<8x128xf32>
    %40 = arith.addf %37, %39 : vector<8x128xf32>
    %cst_22 = arith.constant 5.000000e-01 : f32
    %41 = vector.broadcast %cst_22 : f32 to vector<8x128xf32>
    %42 = arith.mulf %41, %40 : vector<8x128xf32>
    %43 = math.tanh %42 : vector<8x128xf32>
    %cst_23 = arith.constant 5.000000e-01 : f32
    %44 = vector.broadcast %cst_23 : f32 to vector<8x128xf32>
    %45 = arith.mulf %44, %43 : vector<8x128xf32>
    %cst_24 = arith.constant 5.000000e-01 : f32
    %46 = vector.broadcast %cst_24 : f32 to vector<8x128xf32>
    %47 = arith.addf %45, %46 : vector<8x128xf32>
    %c0_25 = arith.constant 0 : index
    %c2_26 = arith.constant 2 : index
    %48 = memref.load %arg2[%c0_25, %c2_26] : memref<3x5xf32, #tpu.memory_space<smem>>
    %49 = vector.broadcast %48 : f32 to vector<8x128xf32>
    %50 = arith.mulf %1, %49 : vector<8x128xf32>
    %c1_27 = arith.constant 1 : index
    %c2_28 = arith.constant 2 : index
    %51 = memref.load %arg2[%c1_27, %c2_28] : memref<3x5xf32, #tpu.memory_space<smem>>
    %52 = vector.broadcast %51 : f32 to vector<8x128xf32>
    %53 = arith.mulf %3, %52 : vector<8x128xf32>
    %54 = arith.addf %50, %53 : vector<8x128xf32>
    %c2_29 = arith.constant 2 : index
    %c2_30 = arith.constant 2 : index
    %55 = memref.load %arg2[%c2_29, %c2_30] : memref<3x5xf32, #tpu.memory_space<smem>>
    %56 = vector.broadcast %55 : f32 to vector<8x128xf32>
    %57 = arith.mulf %5, %56 : vector<8x128xf32>
    %58 = arith.addf %54, %57 : vector<8x128xf32>
    %c2_31 = arith.constant 2 : index
    %59 = memref.load %arg3[%c2_31] : memref<5xf32, #tpu.memory_space<smem>>
    %60 = vector.broadcast %59 : f32 to vector<8x128xf32>
    %61 = arith.addf %58, %60 : vector<8x128xf32>
    %cst_32 = arith.constant 5.000000e-01 : f32
    %62 = vector.broadcast %cst_32 : f32 to vector<8x128xf32>
    %63 = arith.mulf %62, %61 : vector<8x128xf32>
    %64 = math.tanh %63 : vector<8x128xf32>
    %cst_33 = arith.constant 5.000000e-01 : f32
    %65 = vector.broadcast %cst_33 : f32 to vector<8x128xf32>
    %66 = arith.mulf %65, %64 : vector<8x128xf32>
    %cst_34 = arith.constant 5.000000e-01 : f32
    %67 = vector.broadcast %cst_34 : f32 to vector<8x128xf32>
    %68 = arith.addf %66, %67 : vector<8x128xf32>
    %c0_35 = arith.constant 0 : index
    %c3 = arith.constant 3 : index
    %69 = memref.load %arg2[%c0_35, %c3] : memref<3x5xf32, #tpu.memory_space<smem>>
    %70 = vector.broadcast %69 : f32 to vector<8x128xf32>
    %71 = arith.mulf %1, %70 : vector<8x128xf32>
    %c1_36 = arith.constant 1 : index
    %c3_37 = arith.constant 3 : index
    %72 = memref.load %arg2[%c1_36, %c3_37] : memref<3x5xf32, #tpu.memory_space<smem>>
    %73 = vector.broadcast %72 : f32 to vector<8x128xf32>
    %74 = arith.mulf %3, %73 : vector<8x128xf32>
    %75 = arith.addf %71, %74 : vector<8x128xf32>
    %c2_38 = arith.constant 2 : index
    %c3_39 = arith.constant 3 : index
    %76 = memref.load %arg2[%c2_38, %c3_39] : memref<3x5xf32, #tpu.memory_space<smem>>
    %77 = vector.broadcast %76 : f32 to vector<8x128xf32>
    %78 = arith.mulf %5, %77 : vector<8x128xf32>
    %79 = arith.addf %75, %78 : vector<8x128xf32>
    %c3_40 = arith.constant 3 : index
    %80 = memref.load %arg3[%c3_40] : memref<5xf32, #tpu.memory_space<smem>>
    %81 = vector.broadcast %80 : f32 to vector<8x128xf32>
    %82 = arith.addf %79, %81 : vector<8x128xf32>
    %cst_41 = arith.constant 5.000000e-01 : f32
    %83 = vector.broadcast %cst_41 : f32 to vector<8x128xf32>
    %84 = arith.mulf %83, %82 : vector<8x128xf32>
    %85 = math.tanh %84 : vector<8x128xf32>
    %cst_42 = arith.constant 5.000000e-01 : f32
    %86 = vector.broadcast %cst_42 : f32 to vector<8x128xf32>
    %87 = arith.mulf %86, %85 : vector<8x128xf32>
    %cst_43 = arith.constant 5.000000e-01 : f32
    %88 = vector.broadcast %cst_43 : f32 to vector<8x128xf32>
    %89 = arith.addf %87, %88 : vector<8x128xf32>
    %c0_44 = arith.constant 0 : index
    %c4 = arith.constant 4 : index
    %90 = memref.load %arg2[%c0_44, %c4] : memref<3x5xf32, #tpu.memory_space<smem>>
    %91 = vector.broadcast %90 : f32 to vector<8x128xf32>
    %92 = arith.mulf %1, %91 : vector<8x128xf32>
    %c1_45 = arith.constant 1 : index
    %c4_46 = arith.constant 4 : index
    %93 = memref.load %arg2[%c1_45, %c4_46] : memref<3x5xf32, #tpu.memory_space<smem>>
    %94 = vector.broadcast %93 : f32 to vector<8x128xf32>
    %95 = arith.mulf %3, %94 : vector<8x128xf32>
    %96 = arith.addf %92, %95 : vector<8x128xf32>
    %c2_47 = arith.constant 2 : index
    %c4_48 = arith.constant 4 : index
    %97 = memref.load %arg2[%c2_47, %c4_48] : memref<3x5xf32, #tpu.memory_space<smem>>
    %98 = vector.broadcast %97 : f32 to vector<8x128xf32>
    %99 = arith.mulf %5, %98 : vector<8x128xf32>
    %100 = arith.addf %96, %99 : vector<8x128xf32>
    %c4_49 = arith.constant 4 : index
    %101 = memref.load %arg3[%c4_49] : memref<5xf32, #tpu.memory_space<smem>>
    %102 = vector.broadcast %101 : f32 to vector<8x128xf32>
    %103 = arith.addf %100, %102 : vector<8x128xf32>
    %cst_50 = arith.constant 5.000000e-01 : f32
    %104 = vector.broadcast %cst_50 : f32 to vector<8x128xf32>
    %105 = arith.mulf %104, %103 : vector<8x128xf32>
    %106 = math.tanh %105 : vector<8x128xf32>
    %cst_51 = arith.constant 5.000000e-01 : f32
    %107 = vector.broadcast %cst_51 : f32 to vector<8x128xf32>
    %108 = arith.mulf %107, %106 : vector<8x128xf32>
    %cst_52 = arith.constant 5.000000e-01 : f32
    %109 = vector.broadcast %cst_52 : f32 to vector<8x128xf32>
    %110 = arith.addf %108, %109 : vector<8x128xf32>
    %c0_53 = arith.constant 0 : index
    %c0_54 = arith.constant 0 : index
    %111 = memref.load %arg4[%c0_53, %c0_54] : memref<3x5xf32, #tpu.memory_space<smem>>
    %112 = vector.broadcast %111 : f32 to vector<8x128xf32>
    %113 = arith.mulf %26, %112 : vector<8x128xf32>
    %c0_55 = arith.constant 0 : index
    %c1_56 = arith.constant 1 : index
    %114 = memref.load %arg4[%c0_55, %c1_56] : memref<3x5xf32, #tpu.memory_space<smem>>
    %115 = vector.broadcast %114 : f32 to vector<8x128xf32>
    %116 = arith.mulf %47, %115 : vector<8x128xf32>
    %117 = arith.addf %113, %116 : vector<8x128xf32>
    %c0_57 = arith.constant 0 : index
    %c2_58 = arith.constant 2 : index
    %118 = memref.load %arg4[%c0_57, %c2_58] : memref<3x5xf32, #tpu.memory_space<smem>>
    %119 = vector.broadcast %118 : f32 to vector<8x128xf32>
    %120 = arith.mulf %68, %119 : vector<8x128xf32>
    %121 = arith.addf %117, %120 : vector<8x128xf32>
    %c0_59 = arith.constant 0 : index
    %c3_60 = arith.constant 3 : index
    %122 = memref.load %arg4[%c0_59, %c3_60] : memref<3x5xf32, #tpu.memory_space<smem>>
    %123 = vector.broadcast %122 : f32 to vector<8x128xf32>
    %124 = arith.mulf %89, %123 : vector<8x128xf32>
    %125 = arith.addf %121, %124 : vector<8x128xf32>
    %c0_61 = arith.constant 0 : index
    %c4_62 = arith.constant 4 : index
    %126 = memref.load %arg4[%c0_61, %c4_62] : memref<3x5xf32, #tpu.memory_space<smem>>
    %127 = vector.broadcast %126 : f32 to vector<8x128xf32>
    %128 = arith.mulf %110, %127 : vector<8x128xf32>
    %129 = arith.addf %125, %128 : vector<8x128xf32>
    %c0_63 = arith.constant 0 : index
    %130 = memref.load %arg5[%c0_63] : memref<3xf32, #tpu.memory_space<smem>>
    %131 = vector.broadcast %130 : f32 to vector<8x128xf32>
    %132 = arith.addf %129, %131 : vector<8x128xf32>
    %cst_64 = arith.constant 5.000000e-01 : f32
    %133 = vector.broadcast %cst_64 : f32 to vector<8x128xf32>
    %134 = arith.mulf %133, %132 : vector<8x128xf32>
    %135 = math.tanh %134 : vector<8x128xf32>
    %cst_65 = arith.constant 5.000000e-01 : f32
    %136 = vector.broadcast %cst_65 : f32 to vector<8x128xf32>
    %137 = arith.mulf %136, %135 : vector<8x128xf32>
    %cst_66 = arith.constant 5.000000e-01 : f32
    %138 = vector.broadcast %cst_66 : f32 to vector<8x128xf32>
    %139 = arith.addf %137, %138 : vector<8x128xf32>
    %c0_67 = arith.constant 0 : index
    %c0_68 = arith.constant 0 : index
    %c0_69 = arith.constant 0 : index
    %140 = vector.load %arg6[%c0_67, %c0_68, %c0_69] : memref<3x8x128xf32, #tpu.memory_space<vmem>>, vector<1x8x128xf32>
    %141 = vector.shape_cast %140 : vector<1x8x128xf32> to vector<8x128xf32>
    %142 = vector.shape_cast %139 : vector<8x128xf32> to vector<1x8x128xf32>
    tpu.vector_store %arg6[%c0_67, %c0_68, %c0_69], %142 {strides = array<i32>} : memref<3x8x128xf32, #tpu.memory_space<vmem>>, vector<1x8x128xf32>,
    %c1_70 = arith.constant 1 : index
    %c0_71 = arith.constant 0 : index
    %143 = memref.load %arg4[%c1_70, %c0_71] : memref<3x5xf32, #tpu.memory_space<smem>>
    %144 = vector.broadcast %143 : f32 to vector<8x128xf32>
    %145 = arith.mulf %26, %144 : vector<8x128xf32>
    %c1_72 = arith.constant 1 : index
    %c1_73 = arith.constant 1 : index
    %146 = memref.load %arg4[%c1_72, %c1_73] : memref<3x5xf32, #tpu.memory_space<smem>>
    %147 = vector.broadcast %146 : f32 to vector<8x128xf32>
    %148 = arith.mulf %47, %147 : vector<8x128xf32>
    %149 = arith.addf %145, %148 : vector<8x128xf32>
    %c1_74 = arith.constant 1 : index
    %c2_75 = arith.constant 2 : index
    %150 = memref.load %arg4[%c1_74, %c2_75] : memref<3x5xf32, #tpu.memory_space<smem>>
    %151 = vector.broadcast %150 : f32 to vector<8x128xf32>
    %152 = arith.mulf %68, %151 : vector<8x128xf32>
    %153 = arith.addf %149, %152 : vector<8x128xf32>
    %c1_76 = arith.constant 1 : index
    %c3_77 = arith.constant 3 : index
    %154 = memref.load %arg4[%c1_76, %c3_77] : memref<3x5xf32, #tpu.memory_space<smem>>
    %155 = vector.broadcast %154 : f32 to vector<8x128xf32>
    %156 = arith.mulf %89, %155 : vector<8x128xf32>
    %157 = arith.addf %153, %156 : vector<8x128xf32>
    %c1_78 = arith.constant 1 : index
    %c4_79 = arith.constant 4 : index
    %158 = memref.load %arg4[%c1_78, %c4_79] : memref<3x5xf32, #tpu.memory_space<smem>>
    %159 = vector.broadcast %158 : f32 to vector<8x128xf32>
    %160 = arith.mulf %110, %159 : vector<8x128xf32>
    %161 = arith.addf %157, %160 : vector<8x128xf32>
    %c1_80 = arith.constant 1 : index
    %162 = memref.load %arg5[%c1_80] : memref<3xf32, #tpu.memory_space<smem>>
    %163 = vector.broadcast %162 : f32 to vector<8x128xf32>
    %164 = arith.addf %161, %163 : vector<8x128xf32>
    %cst_81 = arith.constant 5.000000e-01 : f32
    %165 = vector.broadcast %cst_81 : f32 to vector<8x128xf32>
    %166 = arith.mulf %165, %164 : vector<8x128xf32>
    %167 = math.tanh %166 : vector<8x128xf32>
    %cst_82 = arith.constant 5.000000e-01 : f32
    %168 = vector.broadcast %cst_82 : f32 to vector<8x128xf32>
    %169 = arith.mulf %168, %167 : vector<8x128xf32>
    %cst_83 = arith.constant 5.000000e-01 : f32
    %170 = vector.broadcast %cst_83 : f32 to vector<8x128xf32>
    %171 = arith.addf %169, %170 : vector<8x128xf32>
    %c1_84 = arith.constant 1 : index
    %c0_85 = arith.constant 0 : index
    %c0_86 = arith.constant 0 : index
    %172 = vector.load %arg6[%c1_84, %c0_85, %c0_86] : memref<3x8x128xf32, #tpu.memory_space<vmem>>, vector<1x8x128xf32>
    %173 = vector.shape_cast %172 : vector<1x8x128xf32> to vector<8x128xf32>
    %174 = vector.shape_cast %171 : vector<8x128xf32> to vector<1x8x128xf32>
    tpu.vector_store %arg6[%c1_84, %c0_85, %c0_86], %174 {strides = array<i32>} : memref<3x8x128xf32, #tpu.memory_space<vmem>>, vector<1x8x128xf32>,
    %c2_87 = arith.constant 2 : index
    %c0_88 = arith.constant 0 : index
    %175 = memref.load %arg4[%c2_87, %c0_88] : memref<3x5xf32, #tpu.memory_space<smem>>
    %176 = vector.broadcast %175 : f32 to vector<8x128xf32>
    %177 = arith.mulf %26, %176 : vector<8x128xf32>
    %c2_89 = arith.constant 2 : index
    %c1_90 = arith.constant 1 : index
    %178 = memref.load %arg4[%c2_89, %c1_90] : memref<3x5xf32, #tpu.memory_space<smem>>
    %179 = vector.broadcast %178 : f32 to vector<8x128xf32>
    %180 = arith.mulf %47, %179 : vector<8x128xf32>
    %181 = arith.addf %177, %180 : vector<8x128xf32>
    %c2_91 = arith.constant 2 : index
    %c2_92 = arith.constant 2 : index
    %182 = memref.load %arg4[%c2_91, %c2_92] : memref<3x5xf32, #tpu.memory_space<smem>>
    %183 = vector.broadcast %182 : f32 to vector<8x128xf32>
    %184 = arith.mulf %68, %183 : vector<8x128xf32>
    %185 = arith.addf %181, %184 : vector<8x128xf32>
    %c2_93 = arith.constant 2 : index
    %c3_94 = arith.constant 3 : index
    %186 = memref.load %arg4[%c2_93, %c3_94] : memref<3x5xf32, #tpu.memory_space<smem>>
    %187 = vector.broadcast %186 : f32 to vector<8x128xf32>
    %188 = arith.mulf %89, %187 : vector<8x128xf32>
    %189 = arith.addf %185, %188 : vector<8x128xf32>
    %c2_95 = arith.constant 2 : index
    %c4_96 = arith.constant 4 : index
    %190 = memref.load %arg4[%c2_95, %c4_96] : memref<3x5xf32, #tpu.memory_space<smem>>
    %191 = vector.broadcast %190 : f32 to vector<8x128xf32>
    %192 = arith.mulf %110, %191 : vector<8x128xf32>
    %193 = arith.addf %189, %192 : vector<8x128xf32>
    %c2_97 = arith.constant 2 : index
    %194 = memref.load %arg5[%c2_97] : memref<3xf32, #tpu.memory_space<smem>>
    %195 = vector.broadcast %194 : f32 to vector<8x128xf32>
    %196 = arith.addf %193, %195 : vector<8x128xf32>
    %cst_98 = arith.constant 5.000000e-01 : f32
    %197 = vector.broadcast %cst_98 : f32 to vector<8x128xf32>
    %198 = arith.mulf %197, %196 : vector<8x128xf32>
    %199 = math.tanh %198 : vector<8x128xf32>
    %cst_99 = arith.constant 5.000000e-01 : f32
    %200 = vector.broadcast %cst_99 : f32 to vector<8x128xf32>
    %201 = arith.mulf %200, %199 : vector<8x128xf32>
    %cst_100 = arith.constant 5.000000e-01 : f32
    %202 = vector.broadcast %cst_100 : f32 to vector<8x128xf32>
    %203 = arith.addf %201, %202 : vector<8x128xf32>
    %c2_101 = arith.constant 2 : index
    %c0_102 = arith.constant 0 : index
    %c0_103 = arith.constant 0 : index
    %204 = vector.load %arg6[%c2_101, %c0_102, %c0_103] : memref<3x8x128xf32, #tpu.memory_space<vmem>>, vector<1x8x128xf32>
    %205 = vector.shape_cast %204 : vector<1x8x128xf32> to vector<8x128xf32>
    %206 = vector.shape_cast %203 : vector<8x128xf32> to vector<1x8x128xf32>
    tpu.vector_store %arg6[%c2_101, %c0_102, %c0_103], %206 {strides = array<i32>} : memref<3x8x128xf32, #tpu.memory_space<vmem>>, vector<1x8x128xf32>,
    return
  }
  func.func @transform_0(%arg0: i32) -> (i32, i32, i32) {
    %c0_i32 = arith.constant 0 : i32
    %c0_i32_0 = arith.constant 0 : i32
    %c0_i32_1 = arith.constant 0 : i32
    return %c0_i32, %arg0, %c0_i32_0 : i32, i32, i32
  }
  func.func @transform_1(%arg0: i32) -> (i32, i32) {
    %c0_i32 = arith.constant 0 : i32
    %c0_i32_0 = arith.constant 0 : i32
    %c0_i32_1 = arith.constant 0 : i32
    return %c0_i32, %c0_i32_0 : i32, i32
  }
  func.func @transform_2(%arg0: i32) -> i32 {
    %c0_i32 = arith.constant 0 : i32
    %c0_i32_0 = arith.constant 0 : i32
    return %c0_i32 : i32
  }
  func.func @transform_3(%arg0: i32) -> (i32, i32) {
    %c0_i32 = arith.constant 0 : i32
    %c0_i32_0 = arith.constant 0 : i32
    %c0_i32_1 = arith.constant 0 : i32
    return %c0_i32, %c0_i32_0 : i32, i32
  }
  func.func @transform_4(%arg0: i32) -> i32 {
    %c0_i32 = arith.constant 0 : i32
    %c0_i32_0 = arith.constant 0 : i32
    return %c0_i32 : i32
  }
  func.func @transform_5(%arg0: i32) -> (i32, i32, i32) {
    %c0_i32 = arith.constant 0 : i32
    %c0_i32_0 = arith.constant 0 : i32
    %c0_i32_1 = arith.constant 0 : i32
    return %c0_i32, %arg0, %c0_i32_0 : i32, i32, i32
  }
}

</mosaic_0001>

<llo_original>
// kernel: tpu_custom_call.1
$region0: #{tpu_custom_call.1}
  #allocation0 [shape = 'u32[]', space=smem, size = 0x4, offset = 0x4, fixed_abs, tag = 'smem constant byte address 0x4 - core index']
  #allocation1 [shape = 'u32[72,128]{1,0:T(1,128)}', space=vmem, size = 0x9000, scoped, tag = 'internal scratch']
  %s0 = inlined_call_operand.hbm [shape: f32[3,8,128], index: 0, kind: input, shape index: {}]
  %s1 = inlined_call_operand.hbm [shape: f32[3,5], index: 1, kind: input, shape index: {}]
  %s2 = inlined_call_operand.vmem [shape: f32[5], index: 2, kind: input, shape index: {}]
  %s3 = inlined_call_operand.hbm [shape: f32[3,5], index: 3, kind: input, shape index: {}]
  %s4 = inlined_call_operand.vmem [shape: f32[3], index: 4, kind: input, shape index: {}]
  %s5 = inlined_call_operand.hbm [shape: f32[3,8,128], index: 5, kind: output, shape index: {}]
  %s6 = sld [smem:[#allocation0]]
  $region50: #{tpu_custom_call.1} parent=0
    _
  %s8 = ssub.s32 1, %s6
  %s9 = scalar_select 0, %s8, %s6
  $region1: #{tpu_custom_call.1} parent=0
    #allocation2 [shape = 'u8[12288]{0}', space=vmem, size = 0x3000, scoped, tag = 'input window, operand 0, single buffered']
    #allocation3 [shape = 's32[1]{0}', space=sflag, size = 0x4, scoped, tag = 'scoped memory for tpu_custom_call.1']
    #allocation4 [shape = 's32[1]{0}', space=sflag, size = 0x4, scoped, tag = 'scoped memory for tpu_custom_call.1']
    #allocation5 [shape = 's32[1]{0}', space=sflag, size = 0x4, scoped, tag = 'scoped memory for tpu_custom_call.1']
    #allocation6 [shape = 's32[1]{0}', space=sflag, size = 0x4, scoped, tag = 'scoped memory for tpu_custom_call.1']
    #allocation7 [shape = 'u8[2048]{0}', space=smem, size = 0x800, scoped, tag = 'input window, operand 1, single buffered']
    #allocation8 [shape = 'u8[512]{0}', space=smem, size = 0x200, scoped, tag = 'input window, operand 2, single buffered']
    #allocation9 [shape = 'u8[2048]{0}', space=smem, size = 0x800, scoped, tag = 'input window, operand 3, single buffered']
    #allocation10 [shape = 's32[1]{0}', space=sflag, size = 0x4, scoped, tag = 'scoped memory for tpu_custom_call.1']
    #allocation11 [shape = 'u8[512]{0}', space=smem, size = 0x200, scoped, tag = 'input window, operand 4, single buffered']
    #allocation12 [shape = 's32[1]{0}', space=sflag, size = 0x4, scoped, tag = 'scoped memory for tpu_custom_call.1']
    #allocation13 [shape = 'u8[12288]{0}', space=vmem, size = 0x3000, scoped, tag = 'output window, operand 0, single buffered']
    %10 = vsyncpa [#allocation3], 0
    %11 = vsyncpa [#allocation5], 0
    %12 = vsyncpa [#allocation6], 0
    %13 = vsyncpa [#allocation10], 0
    %14 = vsyncpa [#allocation12], 0
    %15 = vsyncpa [#allocation4], 0
    // Predicated region
    $region2: #{tpu_custom_call.1} parent=1 // pred_check
      _
    $region3: #{tpu_custom_call.1} parent=1 // pred_check_branch
      %17 = sbr.rel (0) target = $region5
    $region4: #{tpu_custom_call.1} parent=1 // pred_region
      %19 = vsyncadd [#allocation3], 0
      %s20 = sshll.u32 %s0, 4
      %s21 = int_to_ptr.hbm [resolvable:$true] %s20
      %s22 = sshll.u32 [#allocation2], 4
      %s23 = int_to_ptr.vmem [resolvable:$true] %s22
      %28 = dma.hbm_to_vmem [thread:$0]  %s21, 384, %s23, [#allocation3], 128, 128, 8
    $region5: #{tpu_custom_call.1} parent=1 // pred_fallthru
      _
    // Predicated region
    $region6: #{tpu_custom_call.1} parent=1 // pred_check
      _
    $region7: #{tpu_custom_call.1} parent=1 // pred_check_branch
      %30 = sbr.rel (0) target = $region9
    $region8: #{tpu_custom_call.1} parent=1 // pred_region
      %32 = vsyncadd [#allocation5], 0
      %s34 = sshll.u32 %s1, 4
      %s35 = int_to_ptr.hbm [resolvable:$true] %s34
      %37 = dma.hbm_to_smem %s35, 64, [#allocation7], [#allocation5]
    $region9: #{tpu_custom_call.1} parent=1 // pred_fallthru
      _
    // Predicated region
    $region10: #{tpu_custom_call.1} parent=1 // pred_check
      _
    $region11: #{tpu_custom_call.1} parent=1 // pred_check_branch
      %39 = sbr.rel (0) target = $region13
    $region12: #{tpu_custom_call.1} parent=1 // pred_region
      %41 = vsyncadd [#allocation6], 0
      %s43 = sshll.u32 %s2, 4
      %s44 = int_to_ptr.vmem [resolvable:$true] %s43
      %46 = dma.vmem_to_smem %s44, 16, [#allocation8], [#allocation6]
    $region13: #{tpu_custom_call.1} parent=1 // pred_fallthru
      _
    // Predicated region
    $region14: #{tpu_custom_call.1} parent=1 // pred_check
      _
    $region15: #{tpu_custom_call.1} parent=1 // pred_check_branch
      %48 = sbr.rel (0) target = $region17
    $region16: #{tpu_custom_call.1} parent=1 // pred_region
      %50 = vsyncadd [#allocation10], 0
      %s52 = sshll.u32 %s3, 4
      %s53 = int_to_ptr.hbm [resolvable:$true] %s52
      %55 = dma.hbm_to_smem %s53, 64, [#allocation9], [#allocation10]
    $region17: #{tpu_custom_call.1} parent=1 // pred_fallthru
      _
    // Predicated region
    $region18: #{tpu_custom_call.1} parent=1 // pred_check
      _
    $region19: #{tpu_custom_call.1} parent=1 // pred_check_branch
      %57 = sbr.rel (0) target = $region21
    $region20: #{tpu_custom_call.1} parent=1 // pred_region
      %59 = vsyncadd [#allocation12], 0
      %s61 = sshll.u32 %s4, 4
      %s62 = int_to_ptr.vmem [resolvable:$true] %s61
      %64 = dma.vmem_to_smem %s62, 16, [#allocation11], [#allocation12]
    $region21: #{tpu_custom_call.1} parent=1 // pred_fallthru
      _
    // Predicated region
    $region22: #{tpu_custom_call.1} parent=1 // pred_check
      _
    $region23: #{tpu_custom_call.1} parent=1 // pred_check_branch
      %66 = sbr.rel (0) target = $region25
    $region24: #{tpu_custom_call.1} parent=1 // pred_region
      %68 = dma.done [#allocation3], 384
    $region25: #{tpu_custom_call.1} parent=1 // pred_fallthru
      _
    // Predicated region
    $region26: #{tpu_custom_call.1} parent=1 // pred_check
      _
    $region27: #{tpu_custom_call.1} parent=1 // pred_check_branch
      %70 = sbr.rel (0) target = $region29
    $region28: #{tpu_custom_call.1} parent=1 // pred_region
      %72 = dma.done [#allocation5], 64
    $region29: #{tpu_custom_call.1} parent=1 // pred_fallthru
      _
    // Predicated region
    $region30: #{tpu_custom_call.1} parent=1 // pred_check
      _
    $region31: #{tpu_custom_call.1} parent=1 // pred_check_branch
      %74 = sbr.rel (0) target = $region33
    $region32: #{tpu_custom_call.1} parent=1 // pred_region
      %76 = dma.done [#allocation6], 16
    $region33: #{tpu_custom_call.1} parent=1 // pred_fallthru
      _
    // Predicated region
    $region34: #{tpu_custom_call.1} parent=1 // pred_check
      _
    $region35: #{tpu_custom_call.1} parent=1 // pred_check_branch
      %78 = sbr.rel (0) target = $region37
    $region36: #{tpu_custom_call.1} parent=1 // pred_region
      %80 = dma.done [#allocation10], 64
    $region37: #{tpu_custom_call.1} parent=1 // pred_fallthru
      _
    // Predicated region
    $region38: #{tpu_custom_call.1} parent=1 // pred_check
      _
    $region39: #{tpu_custom_call.1} parent=1 // pred_check_branch
      %82 = sbr.rel (0) target = $region41
    $region40: #{tpu_custom_call.1} parent=1 // pred_region
      %84 = dma.done [#allocation12], 16
    $region41: #{tpu_custom_call.1} parent=1 // pred_fallthru
      _
    %85 = sfence
    %v86 = vld [vmem:[#allocation2] sm:$0xff]
    %s87 = scalar_lea.vmem [#allocation2], 8
    %v88 = vld [vmem:[%s87] sm:$0xff]
    %s89 = scalar_lea.vmem [#allocation2], 16
    %v90 = vld [vmem:[%s89] sm:$0xff]
    %s91 = sld [smem:[#allocation7]]
    %v92 = vstv %s91
    %v93 = vmul.f32 %v86, %v92
    %s94 = sld [smem:[#allocation7 + $0x80]]
    %v95 = vstv %s94
    %v96 = vmul.f32 %v88, %v95
    %v97 = vadd.f32 %v93, %v96
    %s98 = sld [smem:[#allocation7 + $0x100]]
    %v99 = vstv %s98
    %v100 = vmul.f32 %v90, %v99
    %v101 = vadd.f32 %v97, %v100
    %s102 = sld [smem:[#allocation8]]
    %v103 = vstv %s102
    %v104 = vadd.f32 %v101, %v103
    %v105 = vmul.f32 %v104, 0.5
    %v106 = vtanh.pop %v105
    %v107 = vmul.f32 %v106, 0.5
    %v108 = vadd.f32 %v107, 0.5
    %s109 = sld [smem:[#allocation7 + $0x1]]
    %v110 = vstv %s109
    %v111 = vmul.f32 %v86, %v110
    %s112 = sld [smem:[#allocation7 + $0x81]]
    %v113 = vstv %s112
    %v114 = vmul.f32 %v88, %v113
    %v115 = vadd.f32 %v111, %v114
    %s116 = sld [smem:[#allocation7 + $0x101]]
    %v117 = vstv %s116
    %v118 = vmul.f32 %v90, %v117
    %v119 = vadd.f32 %v115, %v118
    %s120 = sld [smem:[#allocation8 + $0x1]]
    %v121 = vstv %s120
    %v122 = vadd.f32 %v119, %v121
    %v123 = vmul.f32 %v122, 0.5
    %v124 = vtanh.pop %v123
    %v125 = vmul.f32 %v124, 0.5
    %v126 = vadd.f32 %v125, 0.5
    %s127 = sld [smem:[#allocation7 + $0x2]]
    %v128 = vstv %s127
    %v129 = vmul.f32 %v86, %v128
    %s130 = sld [smem:[#allocation7 + $0x82]]
    %v131 = vstv %s130
    %v132 = vmul.f32 %v88, %v131
    %v133 = vadd.f32 %v129, %v132
    %s134 = sld [smem:[#allocation7 + $0x102]]
    %v135 = vstv %s134
    %v136 = vmul.f32 %v90, %v135
    %v137 = vadd.f32 %v133, %v136
    %s138 = sld [smem:[#allocation8 + $0x2]]
    %v139 = vstv %s138
    %v140 = vadd.f32 %v137, %v139
    %v141 = vmul.f32 %v140, 0.5
    %v142 = vtanh.pop %v141
    %v143 = vmul.f32 %v142, 0.5
    %v144 = vadd.f32 %v143, 0.5
    %s145 = sld [smem:[#allocation7 + $0x3]]
    %v146 = vstv %s145
    %v147 = vmul.f32 %v86, %v146
    %s148 = sld [smem:[#allocation7 + $0x83]]
    %v149 = vstv %s148
    %v150 = vmul.f32 %v88, %v149
    %v151 = vadd.f32 %v147, %v150
    %s152 = sld [smem:[#allocation7 + $0x103]]
    %v153 = vstv %s152
    %v154 = vmul.f32 %v90, %v153
    %v155 = vadd.f32 %v151, %v154
    %s156 = sld [smem:[#allocation8 + $0x3]]
    %v157 = vstv %s156
    %v158 = vadd.f32 %v155, %v157
    %v159 = vmul.f32 %v158, 0.5
    %v160 = vtanh.pop %v159
    %v161 = vmul.f32 %v160, 0.5
    %v162 = vadd.f32 %v161, 0.5
    %s163 = sld [smem:[#allocation7 + $0x4]]
    %v164 = vstv %s163
    %v165 = vmul.f32 %v86, %v164
    %s166 = sld [smem:[#allocation7 + $0x84]]
    %v167 = vstv %s166
    %v168 = vmul.f32 %v88, %v167
    %v169 = vadd.f32 %v165, %v168
    %s170 = sld [smem:[#allocation7 + $0x104]]
    %v171 = vstv %s170
    %v172 = vmul.f32 %v90, %v171
    %v173 = vadd.f32 %v169, %v172
    %s174 = sld [smem:[#allocation8 + $0x4]]
    %v175 = vstv %s174
    %v176 = vadd.f32 %v173, %v175
    %v177 = vmul.f32 %v176, 0.5
    %v178 = vtanh.pop %v177
    %v179 = vmul.f32 %v178, 0.5
    %v180 = vadd.f32 %v179, 0.5
    %s181 = sld [smem:[#allocation9]]
    %v182 = vstv %s181
    %v183 = vmul.f32 %v108, %v182
    %s184 = sld [smem:[#allocation9 + $0x1]]
    %v185 = vstv %s184
    %v186 = vmul.f32 %v126, %v185
    %v187 = vadd.f32 %v183, %v186
    %s188 = sld [smem:[#allocation9 + $0x2]]
    %v189 = vstv %s188
    %v190 = vmul.f32 %v144, %v189
    %v191 = vadd.f32 %v187, %v190
    %s192 = sld [smem:[#allocation9 + $0x3]]
    %v193 = vstv %s192
    %v194 = vmul.f32 %v162, %v193
    %v195 = vadd.f32 %v191, %v194
    %s196 = sld [smem:[#allocation9 + $0x4]]
    %v197 = vstv %s196
    %v198 = vmul.f32 %v180, %v197
    %v199 = vadd.f32 %v195, %v198
    %s200 = sld [smem:[#allocation11]]
    %v201 = vstv %s200
    %v202 = vadd.f32 %v199, %v201
    %v203 = vmul.f32 %v202, 0.5
    %v204 = vtanh.pop %v203
    %v205 = vmul.f32 %v204, 0.5
    %v206 = vadd.f32 %v205, 0.5
    %207 = vst [vmem:[#allocation13] sm:$0xff] %v206
    %s208 = sld [smem:[#allocation9 + $0x80]]
    %v209 = vstv %s208
    %v210 = vmul.f32 %v108, %v209
    %s211 = sld [smem:[#allocation9 + $0x81]]
    %v212 = vstv %s211
    %v213 = vmul.f32 %v126, %v212
    %v214 = vadd.f32 %v210, %v213
    %s215 = sld [smem:[#allocation9 + $0x82]]
    %v216 = vstv %s215
    %v217 = vmul.f32 %v144, %v216
    %v218 = vadd.f32 %v214, %v217
    %s219 = sld [smem:[#allocation9 + $0x83]]
    %v220 = vstv %s219
    %v221 = vmul.f32 %v162, %v220
    %v222 = vadd.f32 %v218, %v221
    %s223 = sld [smem:[#allocation9 + $0x84]]
    %v224 = vstv %s223
    %v225 = vmul.f32 %v180, %v224
    %v226 = vadd.f32 %v222, %v225
    %s227 = sld [smem:[#allocation11 + $0x1]]
    %v228 = vstv %s227
    %v229 = vadd.f32 %v226, %v228
    %v230 = vmul.f32 %v229, 0.5
    %v231 = vtanh.pop %v230
    %v232 = vmul.f32 %v231, 0.5
    %v233 = vadd.f32 %v232, 0.5
    %s234 = scalar_lea.vmem [#allocation13], 8
    %235 = vst [vmem:[%s234] sm:$0xff] %v233
    %s236 = sld [smem:[#allocation9 + $0x100]]
    %v237 = vstv %s236
    %v238 = vmul.f32 %v108, %v237
    %s239 = sld [smem:[#allocation9 + $0x101]]
    %v240 = vstv %s239
    %v241 = vmul.f32 %v126, %v240
    %v242 = vadd.f32 %v238, %v241
    %s243 = sld [smem:[#allocation9 + $0x102]]
    %v244 = vstv %s243
    %v245 = vmul.f32 %v144, %v244
    %v246 = vadd.f32 %v242, %v245
    %s247 = sld [smem:[#allocation9 + $0x103]]
    %v248 = vstv %s247
    %v249 = vmul.f32 %v162, %v248
    %v250 = vadd.f32 %v246, %v249
    %s251 = sld [smem:[#allocation9 + $0x104]]
    %v252 = vstv %s251
    %v253 = vmul.f32 %v180, %v252
    %v254 = vadd.f32 %v250, %v253
    %s255 = sld [smem:[#allocation11 + $0x2]]
    %v256 = vstv %s255
    %v257 = vadd.f32 %v254, %v256
    %v258 = vmul.f32 %v257, 0.5
    %v259 = vtanh.pop %v258
    %v260 = vmul.f32 %v259, 0.5
    %v261 = vadd.f32 %v260, 0.5
    %s262 = scalar_lea.vmem [#allocation13], 16
    %263 = vst [vmem:[%s262] sm:$0xff] %v261
    // Predicated region
    $region42: #{tpu_custom_call.1} parent=1 // pred_check
      _
    $region43: #{tpu_custom_call.1} parent=1 // pred_check_branch
      %265 = sbr.rel (0) target = $region45
    $region44: #{tpu_custom_call.1} parent=1 // pred_region
      %267 = vsyncadd [#allocation4], 0
      %s268 = sshll.u32 [#allocation13], 4
      %s269 = int_to_ptr.vmem [resolvable:$true] %s268
      %s270 = sshll.u32 %s5, 4
      %s271 = int_to_ptr.hbm [resolvable:$true] %s270
      %276 = dma.vmem_to_hbm [thread:$0]  %s269, 384, %s271, [#allocation4], 128, 128, 8
    $region45: #{tpu_custom_call.1} parent=1 // pred_fallthru
      _
    // Predicated region
    $region46: #{tpu_custom_call.1} parent=1 // pred_check
      _
    $region47: #{tpu_custom_call.1} parent=1 // pred_check_branch
      %278 = sbr.rel (0) target = $region49
    $region48: #{tpu_custom_call.1} parent=1 // pred_region
      %280 = dma.done [#allocation4], 384
    $region49: #{tpu_custom_call.1} parent=1 // pred_fallthru
      _
    %281 = vsyncpa [#allocation3], 1
    %282 = vsyncpa [#allocation4], 1
    %283 = vsyncpa [#allocation5], 1
    %284 = vsyncpa [#allocation10], 1
    %285 = vsyncpa [#allocation6], 1
    %286 = vsyncpa [#allocation12], 1

</llo_original>
